<compile_context>
chip_gen: v6e
topology: v6e:2x2x1
jax: 0.10.0
libtpu: 0.0.40
codegen_flags: <defaults>
</compile_context>

<pallas_src>
import functools

import jax
import jax.numpy as jnp
from jax.experimental import pallas as pl
from jax.experimental.pallas import tpu as pltpu


def _round_up(x, m):
    return ((x + m - 1) // m) * m


# ----------------------------------------------------------------------------
# Tiled linear kernel: bf16 MXU matmul, f32 accumulate, fused epilogue
# ----------------------------------------------------------------------------

def _linear_kernel(*refs, nk, has_bias, has_residual, activation):
    it = iter(refs)
    x_ref = next(it)
    w_ref = next(it)
    b_ref = next(it) if has_bias else None
    r_ref = next(it) if has_residual else None
    o_ref = next(it)
    acc_ref = next(it)

    @pl.when(pl.program_id(2) == 0)
    def _init():
        acc_ref[...] = jnp.zeros_like(acc_ref)

    acc_ref[...] += jnp.dot(
        x_ref[...].astype(jnp.bfloat16),       # activations cast in-kernel
        w_ref[...],                             # weights already bf16
        preferred_element_type=jnp.float32)

    @pl.when(pl.program_id(2) == nk - 1)
    def _finalize():
        y = acc_ref[...]
        if has_bias:
            y = y + b_ref[...].astype(jnp.float32)
        if activation == "gelu":
            # tanh-approximate GELU (EUP tanh); negligible diff vs erf GELU
            y = jax.nn.gelu(y, approximate=True)
        if has_residual:
            y = y + r_ref[...].astype(jnp.float32)
        o_ref[...] = y.astype(o_ref.dtype)


def pallas_linear(x2d, w, b=None, residual=None, activation=None,
                  tm=256, tn=256, tk=512):
    """(M,K) @ (K,N) [+ bias] [-> gelu] [+ residual] -> (M,N) float32.

    Tiles are clamped/padded to (8,128)-aligned shapes so any problem size
    works; tile defaults (256/256/512) stay well inside v7x's 32 MiB scoped
    VMEM with double-buffering.
    """
    M, K = x2d.shape
    Kw, N = w.shape
    assert K == Kw

    tm_e = min(tm, _round_up(M, 8))
    tn_e = min(tn, _round_up(N, 128))
    tk_e = min(tk, _round_up(K, 128))
    Mp, Np, Kp = _round_up(M, tm_e), _round_up(N, tn_e), _round_up(K, tk_e)
    nk = Kp // tk_e

    x_p = jnp.pad(x2d.astype(jnp.float32), ((0, Mp - M), (0, Kp - K)))
    w_p = jnp.pad(w.astype(jnp.bfloat16), ((0, Kp - K), (0, Np - N)))

    has_bias = b is not None
    has_residual = residual is not None

    operands = [x_p, w_p]
    in_specs = [
        pl.BlockSpec((tm_e, tk_e), lambda i, j, k: (i, k)),
        pl.BlockSpec((tk_e, tn_e), lambda i, j, k: (k, j)),
    ]
    bytes_accessed = Mp * Kp * 4 + Kp * Np * 2 + Mp * Np * 4
    if has_bias:
        operands.append(jnp.pad(b.reshape(1, N).astype(jnp.float32),
                                ((0, 0), (0, Np - N))))
        in_specs.append(pl.BlockSpec((1, tn_e), lambda i, j, k: (0, j)))
        bytes_accessed += Np * 4
    if has_residual:
        operands.append(jnp.pad(residual.astype(jnp.float32),
                                ((0, Mp - M), (0, Np - N))))
        in_specs.append(pl.BlockSpec((tm_e, tn_e), lambda i, j, k: (i, j)))
        bytes_accessed += Mp * Np * 4

    out = pl.pallas_call(
        functools.partial(_linear_kernel, nk=nk, has_bias=has_bias,
                          has_residual=has_residual, activation=activation),
        out_shape=jax.ShapeDtypeStruct((Mp, Np), jnp.float32),
        grid=(Mp // tm_e, Np // tn_e, nk),
        in_specs=in_specs,
        out_specs=pl.BlockSpec((tm_e, tn_e), lambda i, j, k: (i, j)),
        scratch_shapes=[pltpu.VMEM((tm_e, tn_e), jnp.float32)],
        compiler_params=pltpu.CompilerParams(
            dimension_semantics=("parallel", "parallel", "arbitrary"),
            vmem_limit_bytes=32 * 1024 * 1024),
        cost_estimate=pl.CostEstimate(
            flops=2 * Mp * Np * Kp,
            transcendentals=Mp * Np if activation == "gelu" else 0,
            bytes_accessed=bytes_accessed),
    )(*operands)
    return out[:M, :N]


# ----------------------------------------------------------------------------
# Attention kernel: one grid step per batch image, all heads, fused QKV input
# ----------------------------------------------------------------------------

def _attn_kernel(qkv_ref, o_ref, *, heads, dim_head, scale):
    inner = heads * dim_head
    qkv = qkv_ref[0]                                   # (n, 3*inner) f32
    outs = []
    for h in range(heads):                             # static unrolled loop
        q = qkv[:, h * dim_head:(h + 1) * dim_head].astype(jnp.bfloat16)
        k = qkv[:, inner + h * dim_head:
                   inner + (h + 1) * dim_head].astype(jnp.bfloat16)
        v = qkv[:, 2 * inner + h * dim_head:
                   2 * inner + (h + 1) * dim_head].astype(jnp.bfloat16)
        # q @ k^T without materializing a transpose: contract last dims.
        s = jax.lax.dot_general(
            q, k, (((1,), (1,)), ((), ())),
            preferred_element_type=jnp.float32) * scale
        s = s - jnp.max(s, axis=-1, keepdims=True)
        p = jnp.exp(s)
        p = p * pl.reciprocal(jnp.sum(p, axis=-1, keepdims=True), approx=True)
        outs.append(jnp.dot(p.astype(jnp.bfloat16), v,
                            preferred_element_type=jnp.float32))
    o_ref[0] = jnp.concatenate(outs, axis=-1)          # lane-dense (n, inner)


def pallas_attention(qkv, heads, dim_head, scale):
    """qkv: (b, n, 3*heads*dim_head) fused projection -> (b, n, heads*dim_head)."""
    b, n, three_inner = qkv.shape
    inner = heads * dim_head
    assert three_inner == 3 * inner
    return pl.pallas_call(
        functools.partial(_attn_kernel, heads=heads, dim_head=dim_head,
                          scale=scale),
        out_shape=jax.ShapeDtypeStruct((b, n, inner), jnp.float32),
        grid=(b,),
        in_specs=[pl.BlockSpec((1, n, three_inner), lambda i: (i, 0, 0))],
        out_specs=pl.BlockSpec((1, n, inner), lambda i: (i, 0, 0)),
        compiler_params=pltpu.CompilerParams(
            dimension_semantics=("parallel",),
            vmem_limit_bytes=32 * 1024 * 1024),
        cost_estimate=pl.CostEstimate(
            flops=4 * b * heads * n * n * dim_head,
            transcendentals=b * heads * n * n,
            bytes_accessed=b * n * (3 * inner + inner) * 4),
    )(qkv.astype(jnp.float32))


# ----------------------------------------------------------------------------
# Tiled MSE reduction
# ----------------------------------------------------------------------------

def _mse_kernel(a_ref, b_ref, o_ref, *, denom):
    @pl.when(pl.program_id(0) == 0)
    def _init():
        o_ref[...] = jnp.zeros_like(o_ref)

    d = a_ref[...] - b_ref[...]
    o_ref[...] += jnp.sum(d * d, keepdims=True)

    @pl.when(pl.program_id(0) == pl.num_programs(0) - 1)
    def _finalize():
        # single final division by the GLOBAL element count (not per block)
        o_ref[...] = o_ref[...] * (1.0 / denom)


def pallas_mse(a, b, tm=512):
    a2 = a.reshape(-1, a.shape[-1]).astype(jnp.float32)
    b2 = b.reshape(-1, b.shape[-1]).astype(jnp.float32)
    M, N = a2.shape
    denom = float(a2.size)
    tm_e = min(tm, _round_up(M, 8))
    Np = _round_up(N, 128)
    Mp = _round_up(M, tm_e)
    a_p = jnp.pad(a2, ((0, Mp - M), (0, Np - N)))
    b_p = jnp.pad(b2, ((0, Mp - M), (0, Np - N)))
    out = pl.pallas_call(
        functools.partial(_mse_kernel, denom=denom),
        out_shape=jax.ShapeDtypeStruct((1, 1), jnp.float32),
        grid=(Mp // tm_e,),
        in_specs=[pl.BlockSpec((tm_e, Np), lambda i: (i, 0)),
                  pl.BlockSpec((tm_e, Np), lambda i: (i, 0))],
        out_specs=pl.BlockSpec((1, 1), lambda i: (0, 0)),
        compiler_params=pltpu.CompilerParams(
            dimension_semantics=("arbitrary",),
            vmem_limit_bytes=32 * 1024 * 1024),
        cost_estimate=pl.CostEstimate(
            flops=3 * Mp * Np, transcendentals=0,
            bytes_accessed=2 * Mp * Np * 4 + 4),
    )(a_p, b_p)
    return out[0, 0]


# ----------------------------------------------------------------------------
# Plain-JAX glue
# ----------------------------------------------------------------------------

def layer_norm(x, gamma, beta, eps=1e-5):
    mu = jnp.mean(x, axis=-1, keepdims=True)
    var = jnp.mean((x - mu) ** 2, axis=-1, keepdims=True)
    return (x - mu) / jnp.sqrt(var + eps) * gamma + beta


def transformer(x, params, heads, dim_head):
    """Pre-norm transformer (lucidrains ViT style) with final LayerNorm."""
    b, n, dim = x.shape
    inner = heads * dim_head
    scale = dim_head ** -0.5
    for layer in params["layers"]:
        # --- attention block ---
        x2d = x.reshape(b * n, dim)
        h = layer_norm(x, layer["ln1_g"], layer["ln1_b"])
        qkv = pallas_linear(h.reshape(b * n, dim), layer["w_qkv"])   # no bias
        qkv = qkv.reshape(b, n, 3 * inner)
        attn = pallas_attention(qkv, heads, dim_head, scale)         # (b,n,inner)
        # output projection with fused bias + residual add
        x = pallas_linear(attn.reshape(b * n, inner), layer["w_out"],
                          b=layer["b_out"], residual=x2d).reshape(b, n, dim)
        # --- feed-forward block ---
        x2d = x.reshape(b * n, dim)
        h = layer_norm(x, layer["ln2_g"], layer["ln2_b"])
        h1 = pallas_linear(h.reshape(b * n, dim), layer["w1"],
                           b=layer["b1"], activation="gelu")         # fused GELU
        x = pallas_linear(h1, layer["w2"], b=layer["b2"],
                          residual=x2d).reshape(b, n, dim)           # fused residual
    return layer_norm(x, params["ln_f_g"], params["ln_f_b"])


def make_transformer_params(key, dim, depth, heads, dim_head, mlp_dim):
    inner = heads * dim_head
    layers = []
    for _ in range(depth):
        keys = jax.random.split(key, 9)
        key = keys[0]
        layers.append(dict(
            ln1_g=jnp.ones((dim,), jnp.float32),
            ln1_b=jnp.zeros((dim,), jnp.float32),
            # matmul weights kept in bf16 (MXU operand dtype); biases/LN in f32
            w_qkv=(0.02 * jax.random.normal(keys[1], (dim, 3 * inner),
                                            jnp.float32)).astype(jnp.bfloat16),
            w_out=(0.02 * jax.random.normal(keys[2], (inner, dim),
                                            jnp.float32)).astype(jnp.bfloat16),
            b_out=jnp.zeros((dim,), jnp.float32),
            ln2_g=jnp.ones((dim,), jnp.float32),
            ln2_b=jnp.zeros((dim,), jnp.float32),
            w1=(0.02 * jax.random.normal(keys[3], (dim, mlp_dim),
                                         jnp.float32)).astype(jnp.bfloat16),
            b1=jnp.zeros((mlp_dim,), jnp.float32),
            w2=(0.02 * jax.random.normal(keys[4], (mlp_dim, dim),
                                         jnp.float32)).astype(jnp.bfloat16),
            b2=jnp.zeros((dim,), jnp.float32),
        ))
    return dict(
        layers=layers,
        ln_f_g=jnp.ones((dim,), jnp.float32),
        ln_f_b=jnp.zeros((dim,), jnp.float32),
    )


# ----------------------------------------------------------------------------
# MAE forward
# ----------------------------------------------------------------------------

def to_patches(img, ph, pw):
    # 'b c (h p1) (w p2) -> b (h w) (p1 p2 c)'
    b, c, H, W = img.shape
    x = img.reshape(b, c, H // ph, ph, W // pw, pw)
    x = x.transpose(0, 2, 4, 3, 5, 1)                 # b, h, w, p1, p2, c
    return x.reshape(b, (H // ph) * (W // pw), ph * pw * c)


def patches_to_image(patches, b, c, H, W, ph, pw):
    x = patches.reshape(b, H // ph, W // pw, ph, pw, c)
    x = x.transpose(0, 5, 1, 3, 2, 4)
    return x.reshape(b, c, H, W)


def mae_forward(img, params, cfg, rng):
    b, c, H, W = img.shape
    ph, pw = cfg["patch_h"], cfg["patch_w"]
    heads, dim_head = cfg["heads"], cfg["dim_head"]
    dec_heads, dec_dim_head = cfg["dec_heads"], cfg["dec_dim_head"]
    enc_dim, dec_dim = cfg["encoder_dim"], cfg["decoder_dim"]

    patches = to_patches(img, ph, pw)                 # (b, np, pd)
    batch, num_patches, patch_dim = patches.shape

    # patch embedding (Pallas tiled matmul with fused bias)
    tokens = pallas_linear(
        patches.reshape(batch * num_patches, patch_dim),
        params["patch_w"], b=params["patch_b"],
    ).reshape(batch, num_patches, enc_dim)
    tokens = tokens + params["pos_embedding"][:, 1:num_patches + 1]

    # random masking (torch.rand(...).argsort semantics)
    num_masked = int(cfg["masking_ratio"] * num_patches)
    rng, k_perm, k_noise = jax.random.split(rng, 3)
    rand_indices = jnp.argsort(
        jax.random.uniform(k_perm, (batch, num_patches)), axis=-1)
    masked_indices = rand_indices[:, :num_masked]
    unmasked_indices = rand_indices[:, num_masked:]
    batch_range = jnp.arange(batch)[:, None]

    tokens = jnp.take_along_axis(tokens, unmasked_indices[:, :, None], axis=1)
    masked_patches = jnp.take_along_axis(patches, masked_indices[:, :, None], axis=1)

    # encoder transformer (Pallas matmuls + attention)
    encoded_tokens = transformer(tokens, params["encoder_tf"], heads, dim_head)

    # encoder -> decoder projection
    n_un = encoded_tokens.shape[1]
    decoder_tokens = pallas_linear(
        encoded_tokens.reshape(batch * n_un, enc_dim),
        params["enc2dec_w"], b=params["enc2dec_b"],
    ).reshape(batch, n_un, dec_dim)
    decoder_tokens = decoder_tokens + params["dec_pos_emb"][unmasked_indices]

    mask_tokens = jnp.broadcast_to(
        params["mask_token"][None, None, :], (batch, num_masked, dec_dim))
    mask_tokens = mask_tokens + params["dec_pos_emb"][masked_indices]

    decoder_in = jnp.concatenate([mask_tokens, decoder_tokens], axis=1)
    decoded = transformer(decoder_in, params["decoder_tf"], dec_heads, dec_dim_head)

    mask_out = decoded[:, :num_masked]
    pred_pixel_values = pallas_linear(
        mask_out.reshape(batch * num_masked, dec_dim),
        params["pix_w"], b=params["pix_b"],
    ).reshape(batch, num_masked, patch_dim)

    # reconstruction loss (Pallas tiled reduction)
    recon_loss = pallas_mse(pred_pixel_values, masked_patches)

    # reconstructed image with predicted pixels scattered into masked slots
    recons_patches = patches.at[batch_range, masked_indices].set(pred_pixel_values)
    recons_img = patches_to_image(recons_patches, b, c, H, W, ph, pw)

    # image with random noise in the masked slots (torch.randn_like)
    masked_noise = jax.random.normal(k_noise, masked_patches.shape, jnp.float32)
    mask_patches = patches.at[batch_range, masked_indices].set(masked_noise)
    patches_to_img = patches_to_image(mask_patches, b, c, H, W, ph, pw)

    return recon_loss, recons_img, patches_to_img


# ----------------------------------------------------------------------------
# Parameter construction (deterministic, in-script)
# ----------------------------------------------------------------------------

def build_params(key, cfg):
    num_patches = (cfg["H"] // cfg["patch_h"]) * (cfg["W"] // cfg["patch_w"])
    patch_dim = cfg["patch_h"] * cfg["patch_w"] * cfg["C"]
    enc_dim, dec_dim = cfg["encoder_dim"], cfg["decoder_dim"]
    keys = jax.random.split(key, 10)
    return dict(
        patch_w=(0.02 * jax.random.normal(keys[0], (patch_dim, enc_dim),
                                          jnp.float32)).astype(jnp.bfloat16),
        patch_b=jnp.zeros((enc_dim,), jnp.float32),
        pos_embedding=0.02 * jax.random.normal(
            keys[1], (1, num_patches + 1, enc_dim), jnp.float32),
        encoder_tf=make_transformer_params(
            keys[2], enc_dim, cfg["enc_depth"], cfg["heads"], cfg["dim_head"],
            cfg["enc_mlp_dim"]),
        enc2dec_w=(0.02 * jax.random.normal(keys[3], (enc_dim, dec_dim),
                                            jnp.float32)).astype(jnp.bfloat16),
        enc2dec_b=jnp.zeros((dec_dim,), jnp.float32),
        mask_token=jax.random.normal(keys[4], (dec_dim,), jnp.float32),
        decoder_tf=make_transformer_params(
            keys[5], dec_dim, cfg["dec_depth"], cfg["dec_heads"],
            cfg["dec_dim_head"], dec_dim * 4),
        dec_pos_emb=0.02 * jax.random.normal(
            keys[6], (num_patches, dec_dim), jnp.float32),
        pix_w=(0.02 * jax.random.normal(keys[7], (dec_dim, patch_dim),
                                        jnp.float32)).astype(jnp.bfloat16),
        pix_b=jnp.zeros((patch_dim,), jnp.float32),
    )


if __name__ == "__main__":
    cfg = dict(
        B=2, C=3, H=16, W=16,
        patch_h=4, patch_w=4,
        encoder_dim=32, enc_depth=1, heads=4, dim_head=8, enc_mlp_dim=64,
        decoder_dim=16, dec_depth=1, dec_heads=4, dec_dim_head=8,
        masking_ratio=0.75,
    )

    root = jax.random.PRNGKey(0)
    k_img, k_params, k_fwd = jax.random.split(root, 3)

    img = jax.random.normal(k_img, (cfg["B"], cfg["C"], cfg["H"], cfg["W"]),
                            jnp.float32)
    params = build_params(k_params, cfg)

    recon_loss, recons_img, patches_to_img = mae_forward(img, params, cfg, k_fwd)
    jax.block_until_ready((recon_loss, recons_img, patches_to_img))

    assert recons_img.shape == img.shape
    assert patches_to_img.shape == img.shape
    assert recon_loss.shape == ()
    print("KERNEL_OK")
</pallas_src>

<mosaic_0001>
module attributes {stable_mosaic.version = 11 : i64} {
  func.func @_linear_kernel(%arg0: i32, %arg1: i32, %arg2: i32, %arg3: memref<32x128xf32, #tpu.memory_space<vmem>>, %arg4: memref<128x128xbf16, #tpu.memory_space<vmem>>, %arg5: memref<1x128xf32, #tpu.memory_space<vmem>>, %arg6: memref<32x128xf32, #tpu.memory_space<vmem>>, %arg7: memref<32x128xf32, #tpu.memory_space<vmem>>) attributes {dimension_semantics = [#tpu.dimension_semantics<parallel>, #tpu.dimension_semantics<parallel>, #tpu.dimension_semantics<arbitrary>], iteration_bounds = array<i64: 1, 1, 1>, scalar_prefetch = 0 : i64, scratch_operands = 1 : i64, tpu.core_type = #tpu.core_type<tc>, window_params = [{transform_indices = @transform_0, window_bounds = array<i64: 32, 128>}, {transform_indices = @transform_1, window_bounds = array<i64: 128, 128>}, {transform_indices = @transform_2, window_bounds = array<i64: 1, 128>}, {transform_indices = @transform_3, window_bounds = array<i64: 32, 128>}]} {
    %c0_i32 = arith.constant 0 : i32
    %0 = arith.cmpi eq, %arg2, %c0_i32 : i32
    %1 = arith.extui %0 : i1 to i32
    %c0_i32_0 = arith.constant 0 : i32
    %2 = arith.cmpi ne, %1, %c0_i32_0 : i32
    scf.if %2 {
      %cst_10 = arith.constant 0.000000e+00 : f32
      %13 = vector.broadcast %cst_10 : f32 to vector<32x128xf32>
      %c0_11 = arith.constant 0 : index
      %c0_12 = arith.constant 0 : index
      %14 = vector.load %arg7[%c0_11, %c0_12] : memref<32x128xf32, #tpu.memory_space<vmem>>, vector<32x128xf32>
      tpu.vector_store %arg7[%c0_11, %c0_12], %13 {strides = array<i32>} : memref<32x128xf32, #tpu.memory_space<vmem>>, vector<32x128xf32>,
    } else {
    }
    %c0 = arith.constant 0 : index
    %c0_1 = arith.constant 0 : index
    %3 = vector.load %arg7[%c0, %c0_1] : memref<32x128xf32, #tpu.memory_space<vmem>>, vector<32x128xf32>
    %c0_2 = arith.constant 0 : index
    %c0_3 = arith.constant 0 : index
    %4 = vector.load %arg3[%c0_2, %c0_3] : memref<32x128xf32, #tpu.memory_space<vmem>>, vector<32x128xf32>
    %5 = arith.truncf %4 : vector<32x128xf32> to vector<32x128xbf16>
    %c0_4 = arith.constant 0 : index
    %c0_5 = arith.constant 0 : index
    %6 = vector.load %arg4[%c0_4, %c0_5] : memref<128x128xbf16, #tpu.memory_space<vmem>>, vector<128x128xbf16>
    %cst = arith.constant dense<0.000000e+00> : vector<32x128xf32>
    %7 = tpu.matmul %5, %6, %cst {dimension_numbers = #tpu.dot_dimension_numbers<[1], [0], [0], [1], [0, 0, 1, 1], [], []>} : vector<32x128xbf16>, vector<128x128xbf16>, vector<32x128xf32> -> vector<32x128xf32>
    %8 = arith.addf %3, %7 : vector<32x128xf32>
    %c0_6 = arith.constant 0 : index
    %c0_7 = arith.constant 0 : index
    %9 = vector.load %arg7[%c0_6, %c0_7] : memref<32x128xf32, #tpu.memory_space<vmem>>, vector<32x128xf32>
    tpu.vector_store %arg7[%c0_6, %c0_7], %8 {strides = array<i32>} : memref<32x128xf32, #tpu.memory_space<vmem>>, vector<32x128xf32>,
    %c0_i32_8 = arith.constant 0 : i32
    %10 = arith.cmpi eq, %arg2, %c0_i32_8 : i32
    %11 = arith.extui %10 : i1 to i32
    %c0_i32_9 = arith.constant 0 : i32
    %12 = arith.cmpi ne, %11, %c0_i32_9 : i32
    scf.if %12 {
      %c0_10 = arith.constant 0 : index
      %c0_11 = arith.constant 0 : index
      %13 = vector.load %arg7[%c0_10, %c0_11] : memref<32x128xf32, #tpu.memory_space<vmem>>, vector<32x128xf32>
      %c0_12 = arith.constant 0 : index
      %c0_13 = arith.constant 0 : index
      %14 = vector.load %arg5[%c0_12, %c0_13] : memref<1x128xf32, #tpu.memory_space<vmem>>, vector<1x128xf32>
      %15 = vector.broadcast %14 : vector<1x128xf32> to vector<32x128xf32>
      %16 = arith.addf %13, %15 : vector<32x128xf32>
      %c0_14 = arith.constant 0 : index
      %c0_15 = arith.constant 0 : index
      %17 = vector.load %arg6[%c0_14, %c0_15] : memref<32x128xf32, #tpu.memory_space<vmem>>, vector<32x128xf32>
      tpu.vector_store %arg6[%c0_14, %c0_15], %16 {strides = array<i32>} : memref<32x128xf32, #tpu.memory_space<vmem>>, vector<32x128xf32>,
    } else {
    }
    return
  }
  func.func @transform_0(%arg0: i32, %arg1: i32, %arg2: i32) -> (i32, i32) {
    %c0_i32 = arith.constant 0 : i32
    return %arg0, %arg2 : i32, i32
  }
  func.func @transform_1(%arg0: i32, %arg1: i32, %arg2: i32) -> (i32, i32) {
    %c0_i32 = arith.constant 0 : i32
    return %arg2, %arg1 : i32, i32
  }
  func.func @transform_2(%arg0: i32, %arg1: i32, %arg2: i32) -> (i32, i32) {
    %c0_i32 = arith.constant 0 : i32
    %c0_i32_0 = arith.constant 0 : i32
    return %c0_i32, %arg1 : i32, i32
  }
  func.func @transform_3(%arg0: i32, %arg1: i32, %arg2: i32) -> (i32, i32) {
    %c0_i32 = arith.constant 0 : i32
    return %arg0, %arg1 : i32, i32
  }
}

</mosaic_0001>

<llo_original>
// kernel: tpu_custom_call.1
$region0: #{tpu_custom_call.1}
  #allocation0 [shape = 'u32[]', space=smem, size = 0x4, offset = 0x4, fixed_abs, tag = 'smem constant byte address 0x4 - core index']
  #allocation1 [shape = 'u32[144,128]{1,0:T(1,128)}', space=vmem, size = 0x12000, scoped, tag = 'internal scratch']
  #allocation2 [shape = 'f32[32,128]{1,0:T(8,128)}', space=vmem, size = 0x4000, scoped, tag = 'scratch operand']
  %s0 = inlined_call_operand.hbm [shape: f32[32,128], index: 0, kind: input, shape index: {}]
  %s1 = inlined_call_operand.hbm [shape: bf16[128,128], index: 1, kind: input, shape index: {}]
  %s2 = inlined_call_operand.vmem [shape: f32[1,128], index: 2, kind: input, shape index: {}]
  %s3 = inlined_call_operand.hbm [shape: f32[32,128], index: 3, kind: output, shape index: {}]
  %s4 = sld [smem:[#allocation0]]
  $region38: #{tpu_custom_call.1} parent=0
    _
  %s6 = ssub.s32 1, %s4
  %s7 = scalar_select 0, %s6, %s4
  $region1: #{tpu_custom_call.1} parent=0
    #allocation3 [shape = 'u8[16384]{0}', space=vmem, size = 0x4000, scoped, tag = 'input window, operand 0, single buffered']
    #allocation4 [shape = 's32[1]{0}', space=sflag, size = 0x4, scoped, tag = 'scoped memory for tpu_custom_call.1']
    #allocation5 [shape = 's32[1]{0}', space=sflag, size = 0x4, scoped, tag = 'scoped memory for tpu_custom_call.1']
    #allocation6 [shape = 'u8[32768]{0}', space=vmem, size = 0x8000, scoped, tag = 'input window, operand 1, single buffered']
    #allocation7 [shape = 's32[1]{0}', space=sflag, size = 0x4, scoped, tag = 'scoped memory for tpu_custom_call.1']
    #allocation8 [shape = 'u8[16384]{0}', space=vmem, size = 0x4000, scoped, tag = 'output window, operand 0, single buffered']
    %8 = vsyncpa [#allocation4], 0
    %9 = vsyncpa [#allocation7], 0
    %10 = vsyncpa [#allocation5], 0
    // Predicated region
    $region2: #{tpu_custom_call.1} parent=1 // pred_check
      _
    $region3: #{tpu_custom_call.1} parent=1 // pred_check_branch
      %12 = sbr.rel (0) target = $region5
    $region4: #{tpu_custom_call.1} parent=1 // pred_region
      %s14 = ssub.s32 512, 512
      %15 = vsyncadd [#allocation4], %s14
      %s16 = sshll.u32 [#allocation3], 4
      %s17 = int_to_ptr.vmem [resolvable:$true] %s16
      %22 = dma.hbm_to_vmem [thread:$0]  %s0, 512, %s17, [#allocation4], 128, 128, 8
    $region5: #{tpu_custom_call.1} parent=1 // pred_fallthru
      _
    // Predicated region
    $region6: #{tpu_custom_call.1} parent=1 // pred_check
      _
    $region7: #{tpu_custom_call.1} parent=1 // pred_check_branch
      %24 = sbr.rel (0) target = $region9
    $region8: #{tpu_custom_call.1} parent=1 // pred_region
      %s26 = ssub.s32 1024, 1024
      %27 = vsyncadd [#allocation7], %s26
      %s28 = sshll.u32 [#allocation6], 4
      %s29 = int_to_ptr.vmem [resolvable:$true] %s28
      %34 = dma.hbm_to_vmem [thread:$0]  %s1, 1024, %s29, [#allocation7], 64, 64, 4
    $region9: #{tpu_custom_call.1} parent=1 // pred_fallthru
      _
    // Predicated region
    $region10: #{tpu_custom_call.1} parent=1 // pred_check
      _
    $region11: #{tpu_custom_call.1} parent=1 // pred_check_branch
      %36 = sbr.rel (0) target = $region13
    $region12: #{tpu_custom_call.1} parent=1 // pred_region
      _
    $region13: #{tpu_custom_call.1} parent=1 // pred_fallthru
      _
    // Predicated region
    $region14: #{tpu_custom_call.1} parent=1 // pred_check
      _
    $region15: #{tpu_custom_call.1} parent=1 // pred_check_branch
      %38 = sbr.rel (0) target = $region17
    $region16: #{tpu_custom_call.1} parent=1 // pred_region
      %39 = dma.done [#allocation4], 512
    $region17: #{tpu_custom_call.1} parent=1 // pred_fallthru
      _
    // Predicated region
    $region18: #{tpu_custom_call.1} parent=1 // pred_check
      _
    $region19: #{tpu_custom_call.1} parent=1 // pred_check_branch
      %41 = sbr.rel (0) target = $region21
    $region20: #{tpu_custom_call.1} parent=1 // pred_region
      %42 = dma.done [#allocation7], 1024
    $region21: #{tpu_custom_call.1} parent=1 // pred_fallthru
      _
    %p44 = scmp.eq.s32.totalorder 0, 0
    // Predicated region
    $region22: #{tpu_custom_call.1} parent=1 // pred_check
      %p45 = pneg %p44
    $region23: #{tpu_custom_call.1} parent=1 // pred_check_branch
      %47 = sbr.rel (%p45) target = $region25
    $region24: #{tpu_custom_call.1} parent=1 // pred_region
      %48 = vst [vmem:[#allocation2] sm:$0xff] 0.0
      %49 = vst [vmem:[#allocation2 + $0x8] sm:$0xff] 0.0
      %50 = vst [vmem:[#allocation2 + $0x10] sm:$0xff] 0.0
      %51 = vst [vmem:[#allocation2 + $0x18] sm:$0xff] 0.0
    $region25: #{tpu_custom_call.1} parent=1 // pred_fallthru
      _
    %v52 = vld [vmem:[#allocation2] sm:$0xff]
    %v53 = vld [vmem:[#allocation2 + $0x8] sm:$0xff]
    %v54 = vld [vmem:[#allocation2 + $0x10] sm:$0xff]
    %v55 = vld [vmem:[#allocation2 + $0x18] sm:$0xff]
    %v56 = vld [vmem:[#allocation3] sm:$0xff]
    %v57 = vld [vmem:[#allocation3 + $0x8] sm:$0xff]
    %v58 = vld [vmem:[#allocation3 + $0x10] sm:$0xff]
    %v59 = vld [vmem:[#allocation3 + $0x18] sm:$0xff]
    %v60 = vpack.c.bf16 %v57, %v56
    %v61 = vpack.c.bf16 %v59, %v58
    %v62 = vld [vmem:[#allocation6] sm:$0xf]
    %v63 = vld [vmem:[#allocation6 + $0x4] sm:$0xf]
    %v64 = vld [vmem:[#allocation6 + $0x8] sm:$0xf]
    %v65 = vld [vmem:[#allocation6 + $0xc] sm:$0xf]
    %v66 = vld [vmem:[#allocation6 + $0x10] sm:$0xf]
    %v67 = vld [vmem:[#allocation6 + $0x14] sm:$0xf]
    %v68 = vld [vmem:[#allocation6 + $0x18] sm:$0xf]
    %v69 = vld [vmem:[#allocation6 + $0x1c] sm:$0xf]
    %v70 = vld [vmem:[#allocation6 + $0x20] sm:$0xf]
    %v71 = vld [vmem:[#allocation6 + $0x24] sm:$0xf]
    %v72 = vld [vmem:[#allocation6 + $0x28] sm:$0xf]
    %v73 = vld [vmem:[#allocation6 + $0x2c] sm:$0xf]
    %v74 = vld [vmem:[#allocation6 + $0x30] sm:$0xf]
    %v75 = vld [vmem:[#allocation6 + $0x34] sm:$0xf]
    %v76 = vld [vmem:[#allocation6 + $0x38] sm:$0xf]
    %v77 = vld [vmem:[#allocation6 + $0x3c] sm:$0xf]
    %v94 = vunpack.c.l.b16 %v62
    %v95 = vunpack.c.l.b16 %v63
    %v96 = vunpack.c.l.b16 %v64
    %v97 = vunpack.c.l.b16 %v65
    %v98 = vunpack.c.l.b16 %v66
    %v99 = vunpack.c.l.b16 %v67
    %v100 = vunpack.c.l.b16 %v68
    %v101 = vunpack.c.l.b16 %v69
    %v102 = vunpack.c.l.b16 %v70
    %v103 = vunpack.c.l.b16 %v71
    %v104 = vunpack.c.l.b16 %v72
    %v105 = vunpack.c.l.b16 %v73
    %v106 = vunpack.c.l.b16 %v74
    %v107 = vunpack.c.l.b16 %v75
    %v108 = vunpack.c.l.b16 %v76
    %v109 = vunpack.c.l.b16 %v77
    %v110 = vpack.c.b16 %v95, %v94
    %v111 = vpack.c.b16 %v97, %v96
    %v112 = vpack.c.b16 %v99, %v98
    %v113 = vpack.c.b16 %v101, %v100
    %v114 = vpack.c.b16 %v103, %v102
    %v115 = vpack.c.b16 %v105, %v104
    %v116 = vpack.c.b16 %v107, %v106
    %v117 = vpack.c.b16 %v109, %v108
    %126 = vmatprep.subr.bf16.mxu0 0
    %127 = vmatpush1.bf16.msra.mxu0 %v117
    %128 = vmatprep.subr.bf16.mxu0 0
    %129 = vmatpush1.bf16.msra.mxu0 %v116
    %130 = vmatprep.subr.bf16.mxu0 0
    %131 = vmatpush1.bf16.msra.mxu0 %v115
    %132 = vmatprep.subr.bf16.mxu0 0
    %133 = vmatpush1.bf16.msra.mxu0 %v114
    %134 = vmatprep.subr.bf16.mxu0 0
    %135 = vmatpush1.bf16.msra.mxu0 %v113
    %136 = vmatprep.subr.bf16.mxu0 0
    %137 = vmatpush1.bf16.msra.mxu0 %v112
    %138 = vmatprep.subr.bf16.mxu0 0
    %139 = vmatpush1.bf16.msra.mxu0 %v111
    %140 = vmatprep.subr.bf16.mxu0 0
    %141 = vmatpush1.bf16.msra.mxu0 %v110
    %142 = vmatprep.subr.bf16.mxu0 0
    %143 = vmatpush2.bf16.msra.mxu0 0
    %144 = vmatprep.subr.bf16.mxu0 0
    %145 = vmatpush2.bf16.msra.mxu0 0
    %146 = vmatprep.subr.bf16.mxu0 0
    %147 = vmatpush2.bf16.msra.mxu0 0
    %148 = vmatprep.subr.bf16.mxu0 0
    %149 = vmatpush2.bf16.msra.mxu0 0
    %150 = vmatprep.subr.bf16.mxu0 0
    %151 = vmatpush2.bf16.msra.mxu0 0
    %152 = vmatprep.subr.bf16.mxu0 0
    %153 = vmatpush2.bf16.msra.mxu0 0
    %154 = vmatprep.subr.bf16.mxu0 0
    %155 = vmatpush2.bf16.msra.mxu0 0
    %156 = vmatprep.subr.bf16.mxu0 0
    %157 = vmatpush2.bf16.msra.mxu0 0
    %158 = vmatprep.mubr.bf16.mxu0 0
    %159 = vmatmul.mubr.bf16.gmra.mxu0 %v60
    %v160 = vpop.f32.mrf.mxu0
    %v161 = vadd.f32 0.0, %v160
    %v162 = vpop.f32.mrf.mxu0
    %v163 = vpop.f32.mrf.mxu0
    %v164 = vadd.f32 0.0, %v163
    %v165 = vpop.f32.mrf.mxu0
    %166 = vmatprep.mubr.bf16.mxu0 0
    %167 = vmatmul.mubr.bf16.gmra.mxu0 %v61
    %v168 = vpop.f32.mrf.mxu0
    %v169 = vadd.f32 0.0, %v168
    %v170 = vpop.f32.mrf.mxu0
    %v171 = vpop.f32.mrf.mxu0
    %v172 = vadd.f32 0.0, %v171
    %v173 = vpop.f32.mrf.mxu0
    %174 = vdwg.mxu0
    %v175 = vadd.f32 %v52, %v161
    %v176 = vadd.f32 %v53, %v164
    %v177 = vadd.f32 %v54, %v169
    %v178 = vadd.f32 %v55, %v172
    %179 = vst [vmem:[#allocation2] sm:$0xff] %v175
    %180 = vst [vmem:[#allocation2 + $0x8] sm:$0xff] %v176
    %181 = vst [vmem:[#allocation2 + $0x10] sm:$0xff] %v177
    %182 = vst [vmem:[#allocation2 + $0x18] sm:$0xff] %v178
    // Predicated region
    $region26: #{tpu_custom_call.1} parent=1 // pred_check
      %p183 = pneg %p44
    $region27: #{tpu_custom_call.1} parent=1 // pred_check_branch
      %185 = sbr.rel (%p183) target = $region29
    $region28: #{tpu_custom_call.1} parent=1 // pred_region
      %v186 = vld [vmem:[#allocation2] sm:$0xff]
      %v187 = vld [vmem:[#allocation2 + $0x8] sm:$0xff]
      %v188 = vld [vmem:[#allocation2 + $0x10] sm:$0xff]
      %v189 = vld [vmem:[#allocation2 + $0x18] sm:$0xff]
      %v190 = vld [vmem:[%s2] sm:$0x1]
      %v192 = vlaneseq
      %v193 = vshrl.u32 %v192, 7
      %v194 = vsub.s32 0, %v193
      %v195 = vrot.slane %v190, %v194
      %v197 = vadd.f32 %v186, %v195
      %v198 = vadd.f32 %v187, %v195
      %v199 = vadd.f32 %v188, %v195
      %v200 = vadd.f32 %v189, %v195
      %201 = vst [vmem:[#allocation8] sm:$0xff] %v197
      %202 = vst [vmem:[#allocation8 + $0x8] sm:$0xff] %v198
      %203 = vst [vmem:[#allocation8 + $0x10] sm:$0xff] %v199
      %204 = vst [vmem:[#allocation8 + $0x18] sm:$0xff] %v200
    $region29: #{tpu_custom_call.1} parent=1 // pred_fallthru
      _
    // Predicated region
    $region30: #{tpu_custom_call.1} parent=1 // pred_check
      _
    $region31: #{tpu_custom_call.1} parent=1 // pred_check_branch
      %206 = sbr.rel (0) target = $region33
    $region32: #{tpu_custom_call.1} parent=1 // pred_region
      %s208 = ssub.s32 512, 512
      %209 = vsyncadd [#allocation5], %s208
      %s210 = sshll.u32 [#allocation8], 4
      %s211 = int_to_ptr.vmem [resolvable:$true] %s210
      %216 = dma.vmem_to_hbm [thread:$0]  %s211, 512, %s3, [#allocation5], 128, 128, 8
    $region33: #{tpu_custom_call.1} parent=1 // pred_fallthru
      _
    // Predicated region
    $region34: #{tpu_custom_call.1} parent=1 // pred_check
      _
    $region35: #{tpu_custom_call.1} parent=1 // pred_check_branch
      %218 = sbr.rel (0) target = $region37
    $region36: #{tpu_custom_call.1} parent=1 // pred_region
      %219 = dma.done [#allocation5], 512
    $region37: #{tpu_custom_call.1} parent=1 // pred_fallthru
      _
    %220 = vsyncpa [#allocation4], 1
    %221 = vsyncpa [#allocation7], 1
    %222 = vsyncpa [#allocation5], 1

</llo_original>
